<compile_context>
chip_gen: v6e
topology: v6e:2x2x1
jax: 0.10.0
libtpu: 0.0.40
codegen_flags: <defaults>
</compile_context>

<pallas_src>
import functools

import jax
import jax.numpy as jnp
from jax import lax
from jax.experimental import pallas as pl
from jax.experimental.pallas import tpu as pltpu


def _round_up(x: int, m: int) -> int:
    return ((x + m - 1) // m) * m


def _vmem_capacity_bytes() -> int:
    """Per-core VMEM capacity; conservative (v7x) fallback if unavailable."""
    try:
        info = pltpu.get_tpu_info()
        cap = getattr(info, "vmem_capacity_bytes", None)
        if cap:
            return int(cap)
    except Exception:
        pass
    return 64 * 1024 * 1024


def _is_v5e() -> bool:
    try:
        kind = jax.devices()[0].device_kind.lower()
        return ("v5 lite" in kind) or ("v5e" in kind) or ("v5litepod" in kind)
    except Exception:
        return False


# --------------------------------------------------------------------------
# Fast path: whole problem fits comfortably in VMEM -> one fused kernel.
# --------------------------------------------------------------------------
def _fused_small_kernel(w_ref, out_ref):
    w = w_ref[...].astype(jnp.float32)                        # (O, K)
    sq = jnp.sum(w * w, axis=1, keepdims=True)                # (O, 1)
    inv = lax.rsqrt(jnp.maximum(sq, 1e-24))                   # 1 / max(||w||, 1e-12)
    wn = (w * inv).astype(jnp.bfloat16)
    cos = lax.dot_general(wn, wn,
                          dimension_numbers=(((1,), (1,)), ((), ())),
                          preferred_element_type=jnp.float32)  # (O, O) f32
    out_ref[...] = jnp.max(cos, axis=0, keepdims=True)         # (1, O)


# --------------------------------------------------------------------------
# General path, pass 1: row-wise L2 normalize + in-kernel zero padding.
# --------------------------------------------------------------------------
def _normalize_pad_kernel(w_ref, wn_ref, *, out_rows, k_in, row_tile):
    """w_ref: (row_tile, k_in) raw weight rows (index map clamped in-bounds).
    wn_ref: (row_tile, k_pad) bf16 output; pad rows / pad K columns are 0."""
    i = pl.program_id(0)
    w = w_ref[...].astype(jnp.float32)                         # (Tr, K_in)
    sq = jnp.sum(w * w, axis=1, keepdims=True)                 # (Tr, 1)
    inv = lax.rsqrt(jnp.maximum(sq, 1e-24))                    # == 1/max(||w||,1e-12)
    # Output-row index of this block (unclamped): rows >= out_rows are padding
    # (or garbage from a clamped / partially OOB input block) -> force 0.
    row = i * row_tile + lax.broadcasted_iota(jnp.int32, (row_tile, 1), 0)
    wn = jnp.where(row < out_rows, w * inv, 0.0)               # (Tr, K_in)
    k_pad = wn_ref.shape[1]
    if k_pad == k_in:
        wn_ref[...] = wn.astype(wn_ref.dtype)
    else:
        wn_ref[...] = jnp.zeros(wn_ref.shape, wn_ref.dtype)
        wn_ref[:, :k_in] = wn.astype(wn_ref.dtype)


# --------------------------------------------------------------------------
# General path, pass 2: column max of cos over upper-triangular block pairs.
# --------------------------------------------------------------------------
def _colmax_pairs_kernel(bi_ref, bj_ref, lhs_ref, rhs_ref, out_ref):
    p = pl.program_id(0)

    @pl.when(p == 0)
    def _init():
        # Column maxima of cos are always >= 0 here: the diagonal
        # cos[i,i] = ||wn_i||^2 >= 0 is never masked (faithful to the PyTorch
        # reference) and padded rows/cols of wn are exactly zero, so a zero
        # init is an identity for the running max.
        out_ref[...] = jnp.zeros_like(out_ref)

    bi = bi_ref[p]          # row-block index of this pair
    bj = bj_ref[p]          # column-block index of this pair (bi <= bj)

    # tile[r, c] = wn[bi*T + r, :] . wn[bj*T + c, :]   (bf16 MXU, f32 acc)
    tile = lax.dot_general(lhs_ref[...], rhs_ref[...],
                           dimension_numbers=(((1,), (1,)), ((), ())),
                           preferred_element_type=jnp.float32)  # (T, T)

    # Contribution to the columns owned by block bj: max over block-bi rows.
    col_max = jnp.max(tile, axis=0, keepdims=True)              # (1, T)
    out_ref[pl.ds(bj, 1), :] = jnp.maximum(out_ref[pl.ds(bj, 1), :], col_max)

    # Contribution to the columns owned by block bi: cos is exactly symmetric
    # (identical bf16 operands and contraction order), so the partial column
    # max over block-bj rows equals the row max of this tile.
    row_max = jnp.max(tile, axis=1)[None, :]                    # (1, T)
    out_ref[pl.ds(bi, 1), :] = jnp.maximum(out_ref[pl.ds(bi, 1), :], row_max)


# --------------------------------------------------------------------------
# Wrapper
# --------------------------------------------------------------------------
def regularface_forward(x, weight):
    """Matches RegularFace.forward(x); the reference forward never uses x."""
    del x  # faithful to the PyTorch module
    out_features, in_features = weight.shape
    k_pad = _round_up(max(in_features, 128), 128)

    vmem_cap = _vmem_capacity_bytes()
    vmem_limit = min(int(vmem_cap * 0.75), 100 * 1024 * 1024)
    tile_budget = int(vmem_limit * 0.85)

    # ---------------- small-problem fast path ----------------
    fast_bytes = (out_features * in_features * 4
                  + out_features * k_pad * 2
                  + out_features * out_features * 4)
    if out_features < 8 or (out_features <= 1024
                            and fast_bytes <= min(28 * 1024 * 1024, tile_budget)):
        w = weight
        if in_features % 128 != 0:
            # Tiny problem: an explicit K pad here is negligible and keeps the
            # MXU contraction over exact zeros.
            w = jnp.pad(w, ((0, 0), (0, k_pad - in_features)))
        colmax = pl.pallas_call(
            _fused_small_kernel,
            out_shape=jax.ShapeDtypeStruct((1, out_features), jnp.float32),
            grid_spec=pltpu.PrefetchScalarGridSpec(
                num_scalar_prefetch=0,
                grid=(1,),
                in_specs=[pl.BlockSpec(w.shape, lambda i: (0, 0))],
                out_specs=pl.BlockSpec((1, out_features), lambda i: (0, 0))),
            compiler_params=pltpu.CompilerParams(
                dimension_semantics=("arbitrary",),
                vmem_limit_bytes=vmem_limit),
        )(w)
        return jnp.sum(colmax) / out_features

    # ---------------- general path ----------------
    # Pass-2 tile: budget double-buffered bf16 lhs/rhs blocks + the (T, T) f32
    # MXU result + the resident (n_blk, T) output against per-core VMEM
    # (v7x: 64 MiB, v5e/v6e: 128 MiB).  Intensity of the streamed operand is
    # ~T FLOP/byte, so prefer T=1024 on v6e/v7x; v5e saturates its MXU earlier.
    candidates = (512, 384, 256, 128) if _is_v5e() else (1024, 768, 512, 384, 256, 128)
    tile = candidates[-1]
    for t in candidates:
        n_b = pl.cdiv(out_features, t)
        need = 8 * t * k_pad + 4 * t * t + 16 * n_b * t
        if need <= tile_budget:
            tile = t
            break
    # TODO(synk): for k_pad so large that even tile=128 blows the VMEM budget,
    # add an inner K grid axis with a (tile, tile) f32 accumulator instead of
    # loading full-K blocks.

    o_pad = _round_up(out_features, tile)
    n_blk = o_pad // tile

    # Pass-1 row tile: ~12 * Tr * k_pad bytes of double-buffered blocks.
    tr = ((tile_budget // 2) // (12 * k_pad)) // 8 * 8
    tr = max(8, min(1024, (out_features // 8) * 8, tr))
    last_in_blk = (out_features - 1) // tr

    wn = pl.pallas_call(
        functools.partial(_normalize_pad_kernel,
                          out_rows=out_features, k_in=in_features, row_tile=tr),
        out_shape=jax.ShapeDtypeStruct((o_pad, k_pad), jnp.bfloat16),
        grid_spec=pltpu.PrefetchScalarGridSpec(
            num_scalar_prefetch=0,
            grid=(pl.cdiv(o_pad, tr),),
            # Clamp so the input block never starts past the real rows; the
            # kernel zeroes any row >= out_features anyway.
            in_specs=[pl.BlockSpec((tr, in_features),
                                   lambda i: (jnp.minimum(i, last_in_blk), 0))],
            out_specs=pl.BlockSpec((tr, k_pad), lambda i: (i, 0))),
        compiler_params=pltpu.CompilerParams(
            dimension_semantics=("parallel",),
            vmem_limit_bytes=vmem_limit),
    )(weight)

    # Upper-triangular block pairs (i <= j), ordered so the rhs/column block j
    # stays resident across each run while the lhs/row block i streams.
    bi_list, bj_list = [], []
    for j in range(n_blk):
        for i in range(j + 1):
            bi_list.append(i)
            bj_list.append(j)
    bi_tbl = jnp.asarray(bi_list, dtype=jnp.int32)
    bj_tbl = jnp.asarray(bj_list, dtype=jnp.int32)
    num_pairs = len(bi_list)
    # TODO(synk): for extremely large out_features (n_blk >~ 500) chunk the
    # pair tables to stay within SMEM, and on v7x split the triangle across a
    # leading size-2 "parallel" grid axis to recover megacore; single-core
    # chips (v5e/v6e) lose nothing from the single "arbitrary" axis.

    colmax = pl.pallas_call(
        _colmax_pairs_kernel,
        out_shape=jax.ShapeDtypeStruct((n_blk, tile), jnp.float32),
        grid_spec=pltpu.PrefetchScalarGridSpec(
            num_scalar_prefetch=2,
            grid=(num_pairs,),
            in_specs=[pl.BlockSpec((tile, k_pad), lambda p, bi, bj: (bi[p], 0)),
                      pl.BlockSpec((tile, k_pad), lambda p, bi, bj: (bj[p], 0))],
            out_specs=pl.BlockSpec((n_blk, tile), lambda p, bi, bj: (0, 0))),
        compiler_params=pltpu.CompilerParams(
            dimension_semantics=("arbitrary",),
            vmem_limit_bytes=vmem_limit),
    )(bi_tbl, bj_tbl, wn, wn)

    # Padded rows/cols contribute exactly 0; final O-element reduce in wrapper.
    return jnp.sum(colmax) / out_features


def regularface_ref(weight):
    """Plain-JAX reproduction of the PyTorch forward (for checking)."""
    o = weight.shape[0]
    wn = weight / jnp.maximum(
        jnp.sqrt(jnp.sum(weight * weight, axis=1, keepdims=True)), 1e-12)
    cos = wn @ wn.T
    idx = jnp.argmax(cos, axis=0)                 # indices[j] = argmax_k cos[k, j]
    picked = cos[jnp.arange(o), idx]              # cos[i, indices[i]]
    return jnp.sum(picked) / o


if __name__ == "__main__":
    key = jax.random.PRNGKey(0)
    kw, kx, kw2 = jax.random.split(key, 3)

    # --- small case (fused fast path), matches the module's small usage ---
    in_features, out_features = 32, 16
    bound = (6.0 / (in_features + out_features)) ** 0.5   # Xavier uniform
    weight = jax.random.uniform(
        kw, (out_features, in_features), jnp.float32, -bound, bound)
    x = jax.random.normal(kx, (2, in_features), dtype=jnp.float32)  # unused by forward

    loss = regularface_forward(x, weight)
    jax.block_until_ready(loss)
    ref = regularface_ref(weight)
    assert jnp.allclose(loss, ref, rtol=1e-2, atol=1e-2), (loss, ref)

    # --- multi-block case: exercises the general path (normalize/pad kernel
    #     + symmetric block-pair column-max kernel with scalar prefetch) ---
    in_f2, out_f2 = 40, 2304
    bound2 = (6.0 / (in_f2 + out_f2)) ** 0.5
    weight2 = jax.random.uniform(
        kw2, (out_f2, in_f2), jnp.float32, -bound2, bound2)
    x2 = jax.random.normal(kx, (2, in_f2), dtype=jnp.float32)

    loss2 = regularface_forward(x2, weight2)
    jax.block_until_ready(loss2)
    ref2 = regularface_ref(weight2)
    assert jnp.allclose(loss2, ref2, rtol=1e-2, atol=1e-2), (loss2, ref2)

    print("KERNEL_OK")
</pallas_src>

<mosaic_0001>
module attributes {stable_mosaic.version = 11 : i64} {
  func.func @_fused_small_kernel(%arg0: i32, %arg1: memref<16x128xf32, #tpu.memory_space<vmem>>, %arg2: memref<1x16xf32, #tpu.memory_space<vmem>>) attributes {dimension_semantics = [#tpu.dimension_semantics<arbitrary>], iteration_bounds = array<i64: 1>, scalar_prefetch = 0 : i64, scratch_operands = 0 : i64, tpu.core_type = #tpu.core_type<tc>, window_params = [{pipeline_mode = #tpu.pipeline_mode<synchronous>, transform_indices = @transform_0, window_bounds = array<i64: 16, 128>}, {pipeline_mode = #tpu.pipeline_mode<synchronous>, transform_indices = @transform_1, window_bounds = array<i64: 1, 16>}]} {
    %c0 = arith.constant 0 : index
    %c0_0 = arith.constant 0 : index
    %0 = vector.load %arg1[%c0, %c0_0] : memref<16x128xf32, #tpu.memory_space<vmem>>, vector<16x128xf32>
    %1 = arith.mulf %0, %0 : vector<16x128xf32>
    %cst = arith.constant dense<0.000000e+00> : vector<16xf32>
    %2 = vector.multi_reduction <add>, %1, %cst [1] : vector<16x128xf32> to vector<16xf32>
    %3 = vector.shape_cast %2 : vector<16xf32> to vector<16x1xf32>
    %cst_1 = arith.constant 1.000000e-24 : f32
    %4 = vector.broadcast %cst_1 : f32 to vector<16x1xf32>
    %5 = arith.maximumf %3, %4 : vector<16x1xf32>
    %6 = math.rsqrt %5 : vector<16x1xf32>
    %7 = vector.broadcast %6 : vector<16x1xf32> to vector<16x128xf32>
    %8 = arith.mulf %0, %7 : vector<16x128xf32>
    %9 = arith.truncf %8 : vector<16x128xf32> to vector<16x128xbf16>
    %cst_2 = arith.constant dense<0.000000e+00> : vector<16x16xf32>
    %10 = tpu.matmul %9, %9, %cst_2 {dimension_numbers = #tpu.dot_dimension_numbers<[1], [1], [0], [0], [0, 0, 1, 0], [], []>} : vector<16x128xbf16>, vector<16x128xbf16>, vector<16x16xf32> -> vector<16x16xf32>
    %cst_3 = arith.constant dense<0xFF800000> : vector<16xf32>
    %11 = vector.multi_reduction <maximumf>, %10, %cst_3 [0] : vector<16x16xf32> to vector<16xf32>
    %12 = vector.shape_cast %11 : vector<16xf32> to vector<1x16xf32>
    %c0_4 = arith.constant 0 : index
    %c0_5 = arith.constant 0 : index
    %13 = vector.load %arg2[%c0_4, %c0_5] : memref<1x16xf32, #tpu.memory_space<vmem>>, vector<1x16xf32>
    tpu.vector_store %arg2[%c0_4, %c0_5], %12 {strides = array<i32>} : memref<1x16xf32, #tpu.memory_space<vmem>>, vector<1x16xf32>,
    return
  }
  func.func @transform_0(%arg0: i32) -> (i32, i32) {
    %c0_i32 = arith.constant 0 : i32
    %c0_i32_0 = arith.constant 0 : i32
    %c0_i32_1 = arith.constant 0 : i32
    return %c0_i32, %c0_i32_0 : i32, i32
  }
  func.func @transform_1(%arg0: i32) -> (i32, i32) {
    %c0_i32 = arith.constant 0 : i32
    %c0_i32_0 = arith.constant 0 : i32
    %c0_i32_1 = arith.constant 0 : i32
    return %c0_i32, %c0_i32_0 : i32, i32
  }
}

</mosaic_0001>

<llo_original>
// kernel: tpu_custom_call.1
$region0: #{tpu_custom_call.1}
  #allocation0 [shape = 'u32[]', space=smem, size = 0x4, offset = 0x4, fixed_abs, tag = 'smem constant byte address 0x4 - core index']
  #allocation1 [shape = 'u32[144,128]{1,0:T(1,128)}', space=vmem, size = 0x12000, scoped, tag = 'internal scratch']
  %s0 = inlined_call_operand.hbm [shape: f32[16,128], index: 0, kind: input, shape index: {}]
  %s1 = inlined_call_operand.hbm [shape: f32[1,16], index: 1, kind: output, shape index: {}]
  %s2 = sld [smem:[#allocation0]]
  $region18: #{tpu_custom_call.1} parent=0
    _
  %s4 = ssub.s32 1, %s2
  %s5 = scalar_select 0, %s4, %s2
  $region1: #{tpu_custom_call.1} parent=0
    #allocation2 [shape = 'u8[8192]{0}', space=vmem, size = 0x2000, scoped, tag = 'input window, operand 0, single buffered']
    #allocation3 [shape = 's32[1]{0}', space=sflag, size = 0x4, scoped, tag = 'scoped memory for tpu_custom_call.1']
    #allocation4 [shape = 's32[1]{0}', space=sflag, size = 0x4, scoped, tag = 'scoped memory for tpu_custom_call.1']
    #allocation5 [shape = 'u8[512]{0}', space=vmem, size = 0x400, scoped, tag = 'output window, operand 0, single buffered']
    %6 = vsyncpa [#allocation3], 0
    %7 = vsyncpa [#allocation4], 0
    // Predicated region
    $region2: #{tpu_custom_call.1} parent=1 // pred_check
      _
    $region3: #{tpu_custom_call.1} parent=1 // pred_check_branch
      %9 = sbr.rel (0) target = $region5
    $region4: #{tpu_custom_call.1} parent=1 // pred_region
      %s11 = ssub.s32 256, 256
      %12 = vsyncadd [#allocation3], %s11
      %s13 = sshll.u32 [#allocation2], 4
      %s14 = int_to_ptr.vmem [resolvable:$true] %s13
      %19 = dma.hbm_to_vmem [thread:$0]  %s0, 256, %s14, [#allocation3], 128, 128, 8
    $region5: #{tpu_custom_call.1} parent=1 // pred_fallthru
      _
    // Predicated region
    $region6: #{tpu_custom_call.1} parent=1 // pred_check
      _
    $region7: #{tpu_custom_call.1} parent=1 // pred_check_branch
      %21 = sbr.rel (0) target = $region9
    $region8: #{tpu_custom_call.1} parent=1 // pred_region
      %22 = dma.done [#allocation3], 256
    $region9: #{tpu_custom_call.1} parent=1 // pred_fallthru
      _
    %v24 = vld [vmem:[#allocation2] sm:$0xff]
    %v25 = vld [vmem:[#allocation2 + $0x8] sm:$0xff]
    %v26 = vmul.f32 %v24, %v24
    %v27 = vmul.f32 %v25, %v25
    %28 = vadd.xlane.f32.xlu0 %v26
    %v29 = vpop.xlane.xlu0 %28
    %30 = vadd.xlane.f32.xlu0 %v27
    %v31 = vpop.xlane.xlu0 %30
    %v32 = vmax.f32 %v29, 1e-24
    %v33 = vmax.f32 %v31, 1e-24
    %v34 = vrsqrt.pop %v32
    %v35 = vrsqrt.pop %v33
    %v36 = vmul.f32 %v24, %v34
    %v37 = vmul.f32 %v25, %v35
    %v38 = vpack.c.bf16 %v37, %v36
    %39 = vmatprep.subr.bf16.mxu0 0
    %40 = vmatpush1.bf16.xpose.msra.mxu0 0
    %41 = vmatprep.subr.bf16.mxu0 0
    %42 = vmatpush1.bf16.xpose.msra.mxu0 0
    %43 = vmatprep.subr.bf16.mxu0 0
    %44 = vmatpush1.bf16.xpose.msra.mxu0 0
    %45 = vmatprep.subr.bf16.mxu0 0
    %46 = vmatpush1.bf16.xpose.msra.mxu0 0
    %47 = vmatprep.subr.bf16.mxu0 0
    %48 = vmatpush1.bf16.xpose.msra.mxu0 0
    %49 = vmatprep.subr.bf16.mxu0 0
    %50 = vmatpush1.bf16.xpose.msra.mxu0 0
    %51 = vmatprep.subr.bf16.mxu0 0
    %52 = vmatpush1.bf16.xpose.msra.mxu0 0
    %53 = vmatprep.subr.bf16.mxu0 0
    %54 = vmatpush1.bf16.xpose.msra.mxu0 %v38
    %55 = vmatprep.subr.bf16.mxu0 0
    %56 = vmatpush2.bf16.xpose.msra.mxu0 0
    %57 = vmatprep.subr.bf16.mxu0 0
    %58 = vmatpush2.bf16.xpose.msra.mxu0 0
    %59 = vmatprep.subr.bf16.mxu0 0
    %60 = vmatpush2.bf16.xpose.msra.mxu0 0
    %61 = vmatprep.subr.bf16.mxu0 0
    %62 = vmatpush2.bf16.xpose.msra.mxu0 0
    %63 = vmatprep.subr.bf16.mxu0 0
    %64 = vmatpush2.bf16.xpose.msra.mxu0 0
    %65 = vmatprep.subr.bf16.mxu0 0
    %66 = vmatpush2.bf16.xpose.msra.mxu0 0
    %67 = vmatprep.subr.bf16.mxu0 0
    %68 = vmatpush2.bf16.xpose.msra.mxu0 0
    %69 = vmatprep.subr.bf16.mxu0 0
    %70 = vmatpush2.bf16.xpose.msra.mxu0 0
    %71 = vmatprep.mubr.bf16.mxu0 0
    %72 = vmatmul.mubr.bf16.gmra.mxu0 %v38
    %v73 = vpop.f32.mrf.mxu0
    %v74 = vadd.f32 0.0, %v73
    %v75 = vpop.f32.mrf.mxu0
    %v76 = vpop.f32.mrf.mxu0
    %v77 = vadd.f32 0.0, %v76
    %v78 = vpop.f32.mrf.mxu0
    %79 = vdwg.mxu0
    %vm80 = vcmask 130048
    %v81 = vsel %vm80, %v74, -inf
    %v82 = vsel %vm80, %v77, -inf
    %v83 = vmax.f32 %v81, %v82
    %v84 = vrot.slane %v83, 4
    %v85 = vmax.f32 %v83, %v84
    %v86 = vrot.slane %v85, 2
    %v87 = vmax.f32 %v85, %v86
    %v88 = vrot.slane %v87, 1
    %v89 = vmax.f32 %v87, %v88
    %vm90 = vcmask 122880
    %91 = vst.msk [vmem:[#allocation5] sm:$0x1] %vm90, %v89
    // Predicated region
    $region10: #{tpu_custom_call.1} parent=1 // pred_check
      _
    $region11: #{tpu_custom_call.1} parent=1 // pred_check_branch
      %93 = sbr.rel (0) target = $region13
    $region12: #{tpu_custom_call.1} parent=1 // pred_region
      %s95 = ssub.s32 16, 16
      %96 = vsyncadd [#allocation4], %s95
      %s98 = sshll.u32 [#allocation5], 4
      %s99 = int_to_ptr.vmem [resolvable:$true] %s98
      %101 = dma.vmem_to_hbm [thread:$0]  %s99, 16, %s1, [#allocation4]
    $region13: #{tpu_custom_call.1} parent=1 // pred_fallthru
      _
    // Predicated region
    $region14: #{tpu_custom_call.1} parent=1 // pred_check
      _
    $region15: #{tpu_custom_call.1} parent=1 // pred_check_branch
      %103 = sbr.rel (0) target = $region17
    $region16: #{tpu_custom_call.1} parent=1 // pred_region
      %104 = dma.done [#allocation4], 16
    $region17: #{tpu_custom_call.1} parent=1 // pred_fallthru
      _
    %105 = vsyncpa [#allocation3], 1
    %106 = vsyncpa [#allocation4], 1

</llo_original>
